<compile_context>
chip_gen: v7x
topology: tpu7x:2x2x1
jax: 0.10.0
libtpu: 0.0.40
codegen_flags: <defaults>
</compile_context>

<pallas_src>
import jax
import jax.numpy as jnp
from jax.experimental import pallas as pl
from jax.experimental.pallas import tpu as pltpu


# ----------------------------------------------------------------------------
# Kernels
# ----------------------------------------------------------------------------
def _alias_noop_kernel(x_ref, o_ref):
    # The output aliases the input at the same HBM address, so there is
    # nothing to move: intentionally a no-op (no DMA, no vector work).
    del x_ref, o_ref


def _make_hbm_copy_kernel(chunks):
    """Build a kernel issuing one HBM->HBM DMA per (start, size) chunk along axis 0.

    All chunk DMAs are started before any is waited on, so up to len(chunks)
    transfers are outstanding simultaneously.
    """

    def kernel(x_ref, o_ref, sems):
        copies = []
        for c, (start, size) in enumerate(chunks):
            cp = pltpu.make_async_copy(
                x_ref.at[start:start + size],
                o_ref.at[start:start + size],
                sems.at[c],
            )
            cp.start()
            copies.append(cp)
        for cp in copies:
            cp.wait()

    return kernel


# ----------------------------------------------------------------------------
# Wrapper
# ----------------------------------------------------------------------------
def naive_identity(x, *, copy=False, max_chunks=4, chunk_bytes=4 << 20):
    """Identity forward pass: returns a tensor equal to x (same shape, dtype).

    copy=False (default): zero-DMA kernel whose output aliases the input
        buffer (semantically matches PyTorch, which returns `x` itself).
        Pair with buffer donation at the jit boundary to make it truly free.
    copy=True: produce a distinct output buffer via chunked HBM->HBM DMAs
        (no VMEM staging), up to `max_chunks` outstanding, ~`chunk_bytes`
        per chunk.
    """
    if x.size == 0:
        return x  # nothing to copy / alias

    nbytes = int(x.size) * jnp.dtype(x.dtype).itemsize

    if not copy:
        # ---- zero-DMA aliased identity --------------------------------------
        return pl.pallas_call(
            _alias_noop_kernel,
            out_shape=jax.ShapeDtypeStruct(x.shape, x.dtype),
            in_specs=[pl.BlockSpec(memory_space=pl.ANY)],
            out_specs=pl.BlockSpec(memory_space=pl.ANY),
            input_output_aliases={0: 0},
            cost_estimate=pl.CostEstimate(
                flops=0, transcendentals=0, bytes_accessed=0),
        )(x)

    # ---- physical copy: chunked HBM->HBM DMA --------------------------------
    squeeze_back = False
    xc = x
    if xc.ndim == 0:
        xc = xc.reshape(1)
        squeeze_back = True

    lead = int(xc.shape[0])
    n_chunks = int(max(1, min(max_chunks, lead, pl.cdiv(nbytes, chunk_bytes))))

    base, rem = divmod(lead, n_chunks)
    chunks = []
    start = 0
    for c in range(n_chunks):
        size = base + (1 if c < rem else 0)
        chunks.append((start, size))
        start += size

    out = pl.pallas_call(
        _make_hbm_copy_kernel(tuple(chunks)),
        out_shape=jax.ShapeDtypeStruct(xc.shape, xc.dtype),
        in_specs=[pl.BlockSpec(memory_space=pl.ANY)],
        out_specs=pl.BlockSpec(memory_space=pl.ANY),
        scratch_shapes=[pltpu.SemaphoreType.DMA((n_chunks,))],
        cost_estimate=pl.CostEstimate(
            flops=0, transcendentals=0, bytes_accessed=2 * nbytes),
    )(xc)

    return out.reshape(()) if squeeze_back else out


# ----------------------------------------------------------------------------
# Self-test
# ----------------------------------------------------------------------------
if __name__ == "__main__":
    key = jax.random.PRNGKey(0)
    # Small NCHW input consistent with typical conv-style usage.
    x = jax.random.normal(key, (2, 4, 16, 16), dtype=jnp.float32)

    # Default path: zero-DMA aliased identity.
    y = jax.block_until_ready(naive_identity(x))
    assert y.shape == x.shape, (y.shape, x.shape)
    assert y.dtype == x.dtype, (y.dtype, x.dtype)
    assert bool(jnp.all(y == x)), "aliased identity output mismatch"

    # Physical-copy path: small chunk_bytes forces 2 outstanding HBM->HBM DMAs.
    y2 = jax.block_until_ready(naive_identity(x, copy=True, chunk_bytes=1024))
    assert y2.shape == x.shape, (y2.shape, x.shape)
    assert y2.dtype == x.dtype, (y2.dtype, x.dtype)
    assert bool(jnp.all(y2 == x)), "copied identity output mismatch"

    print("KERNEL_OK")
</pallas_src>

<mosaic_0001>
module attributes {stable_mosaic.version = 11 : i64} {
  func.func @_alias_noop_kernel(%arg0: memref<2x4x16x16xf32, #tpu.memory_space<any>>, %arg1: memref<2x4x16x16xf32, #tpu.memory_space<any>>) attributes {dimension_semantics = [], scalar_prefetch = 0 : i64, scratch_operands = 0 : i64, tpu.core_type = #tpu.core_type<tc>} {
    return
  }
}

</mosaic_0001>

<llo_original>
// kernel: tpu_custom_call.1
$region0: #{tpu_custom_call.1}
  #allocation0 [shape = 'u32[]', space=smem, size = 0x4, offset = 0x4, fixed_abs, tag = 'smem constant byte address 0x4 - core index']
  #allocation1 [shape = 'u32[144,128]{1,0:T(1,128)}', space=vmem, size = 0x12000, scoped, tag = 'internal scratch']
  %s0 = inlined_call_operand.hbm [shape: f32[2,4,16,16], index: 0, kind: input, shape index: {}, may-alias: {0,1}]
  %s1 = inlined_call_operand.hbm [shape: f32[2,4,16,16], index: 1, kind: output, shape index: {}, may-alias: {0,1}]
  %s2 = sld [smem:[#allocation0]]
  $region2: #{tpu_custom_call.1} parent=0
    _
  %s4 = ssub.s32 1, %s2
  %s5 = scalar_select 0, %s4, %s2

</llo_original>
